<compile_context>
chip_gen: v6e
topology: v6e:2x2x1
jax: 0.10.0
libtpu: 0.0.40
codegen_flags: <defaults>
</compile_context>

<pallas_src>
import functools

import jax
import jax.numpy as jnp
from jax import lax
from jax.experimental import pallas as pl
from jax.experimental.pallas import tpu as pltpu


def _rbm_kernel(v_ref, w_hv_ref, w_vh_ref, vb_ref, hb_ref, rh_ref, rv_ref,
                v_out_ref, h_out_ref, *, k):
    TB = v_ref.shape[0]
    V = v_ref.shape[1]
    H = hb_ref.shape[1]

    # Resident weights in bf16 for the MXU.  Both layouts are pre-made on the
    # host, so no transpose/layout change happens inside the Gibbs chain.
    W_hv = w_hv_ref[...]        # (H, V): used as  h @ W     (h_to_v direction)
    W_vh = w_vh_ref[...]        # (V, H): used as  v @ W.T   (v_to_h direction)

    # Hoist bias broadcasts out of the chain (JAX does not CSE broadcasts).
    vb = jnp.broadcast_to(vb_ref[...], (TB, V))    # f32
    hb = jnp.broadcast_to(hb_ref[...], (TB, H))    # f32

    def v_to_h(v_b, u):
        # sigmoid(v @ W.T + h_bias); elementwise math stays f32 (v5e-safe).
        pre = jnp.dot(v_b, W_vh, preferred_element_type=jnp.float32) + hb
        p = jax.nn.sigmoid(pre)
        # torch: relu(sign(p - rand)) == 1.0 iff p > rand (ties -> 0), exactly
        # reproduced by (p > u).  bf16 {0,1} feeds the next MXU matmul exactly.
        return (p > u).astype(jnp.bfloat16)

    def h_to_v(h_b, u):
        # sigmoid(h @ W + v_bias)
        pre = jnp.dot(h_b, W_hv, preferred_element_type=jnp.float32) + vb
        p = jax.nn.sigmoid(pre)
        return (p > u).astype(jnp.bfloat16)

    v0 = v_ref[...].astype(jnp.bfloat16)
    h_b = v_to_h(v0, rh_ref[0])                    # pre_h1, h1 = v_to_h(v)

    def body(i, carry):
        _, h_prev = carry
        v_n = h_to_v(h_prev, rv_ref[i])
        h_n = v_to_h(v_n, rh_ref[i + 1])
        return (v_n, h_n)

    # fori_loop bounds live ranges for large k; fully unrolled for small k so
    # the LLO scheduler still sees the whole chain.
    v_b, h_b = lax.fori_loop(0, k, body, (v0, h_b), unroll=(k <= 4))

    v_out_ref[...] = v_b.astype(jnp.float32)
    h_out_ref[...] = h_b.astype(jnp.float32)


def rbm_forward(v, W, v_bias, h_bias, key, *, k):
    """Returns (v, v_, h_) matching RBM.forward semantics (k >= 1)."""
    assert k >= 1
    B, V = v.shape
    H = W.shape[0]

    # Batch tile: full batch if small, else 256 rows (>=128 keeps the MXU fed
    # on all generations).
    TB = B if B <= 256 else 256
    grid = (pl.cdiv(B, TB),)

    # Both W layouts in bf16 (MXU-native on v5e/v6e/v7x); transpose done once
    # on the host, never inside the chain.
    W_hv = W.astype(jnp.bfloat16)                      # (H, V)
    W_vh = jnp.transpose(W).astype(jnp.bfloat16)       # (V, H)
    vb2 = v_bias.reshape(1, V).astype(jnp.float32)
    hb2 = h_bias.reshape(1, H).astype(jnp.float32)

    # Host-generated uniforms for the (2k+1) Bernoulli sampling steps.
    kh, kv = jax.random.split(key)
    rand_h = jax.random.uniform(kh, (k + 1, B, H), dtype=jnp.float32)
    rand_v = jax.random.uniform(kv, (k, B, V), dtype=jnp.float32)

    # Advisory cost estimate for XLA scheduling.
    flops = 2 * (2 * k + 1) * B * H * V
    transcendentals = (2 * k + 1) * B * (H + V)
    bytes_accessed = (B * V * 4 + (W_hv.size + W_vh.size) * 2
                      + rand_h.size * 4 + rand_v.size * 4
                      + B * (V + H) * 4)

    # VMEM budget: resident bf16 W (both layouts) + double-buffered batch tiles.
    tile_bytes = (TB * V * 4                      # v tile
                  + (k + 1) * TB * H * 4          # rand_h tile
                  + k * TB * V * 4                # rand_v tile
                  + TB * (V + H) * 4)             # output tiles
    vmem_bytes = (W_hv.size + W_vh.size) * 2 + 2 * tile_bytes + (V + H) * 4
    # Cap at 64 MiB so the same config fits v7x's per-TC VMEM as well.
    vmem_limit = int(min(max(vmem_bytes + (2 << 20), 16 << 20), 64 << 20))

    v_out, h_out = pl.pallas_call(
        functools.partial(_rbm_kernel, k=k),
        grid=grid,
        out_shape=(jax.ShapeDtypeStruct((B, V), jnp.float32),
                   jax.ShapeDtypeStruct((B, H), jnp.float32)),
        in_specs=[
            pl.BlockSpec((TB, V), lambda i: (i, 0)),           # v (batch-tiled)
            pl.BlockSpec((H, V), lambda i: (0, 0)),            # W  (resident)
            pl.BlockSpec((V, H), lambda i: (0, 0)),            # W.T (resident)
            pl.BlockSpec((1, V), lambda i: (0, 0)),            # v_bias
            pl.BlockSpec((1, H), lambda i: (0, 0)),            # h_bias
            pl.BlockSpec((k + 1, TB, H), lambda i: (0, i, 0)),  # rand_h
            pl.BlockSpec((k, TB, V), lambda i: (0, i, 0)),      # rand_v
        ],
        out_specs=(pl.BlockSpec((TB, V), lambda i: (i, 0)),
                   pl.BlockSpec((TB, H), lambda i: (i, 0))),
        compiler_params=pltpu.CompilerParams(
            dimension_semantics=("parallel",),
            vmem_limit_bytes=vmem_limit),
        cost_estimate=pl.CostEstimate(flops=flops,
                                      transcendentals=transcendentals,
                                      bytes_accessed=bytes_accessed),
    )(v.astype(jnp.float32), W_hv, W_vh, vb2, hb2, rand_h, rand_v)

    return v, v_out, h_out


if __name__ == "__main__":
    # Small shapes consistent with the module (n_vis, n_hid scaled down,
    # TPU-tile friendly): batch=8, n_vis=256, n_hid=128, k=3.
    B, N_VIS, N_HID, K = 8, 256, 128, 3

    key = jax.random.PRNGKey(0)
    k_w, k_v, k_chain = jax.random.split(key, 3)

    # Deterministic parameter init (mirrors torch.randn(n_hid, n_vis)*0.01, zeros).
    W = 0.01 * jax.random.normal(k_w, (N_HID, N_VIS), dtype=jnp.float32)
    v_bias = jnp.zeros((N_VIS,), dtype=jnp.float32)
    h_bias = jnp.zeros((N_HID,), dtype=jnp.float32)

    # Binary visible input (ratings-style 0/1 data).
    v_in = (jax.random.uniform(k_v, (B, N_VIS)) < 0.5).astype(jnp.float32)

    v0, v_k, h_k = rbm_forward(v_in, W, v_bias, h_bias, k_chain, k=K)
    jax.block_until_ready((v0, v_k, h_k))

    # Sanity: shapes and {0,1} samples.
    assert v0.shape == (B, N_VIS) and v_k.shape == (B, N_VIS)
    assert h_k.shape == (B, N_HID)
    assert bool(jnp.all((v_k == 0.0) | (v_k == 1.0)))
    assert bool(jnp.all((h_k == 0.0) | (h_k == 1.0)))

    print("KERNEL_OK")
</pallas_src>

<mosaic_0001>
module attributes {stable_mosaic.version = 11 : i64} {
  func.func @_rbm_kernel(%arg0: i32, %arg1: memref<8x256xf32, #tpu.memory_space<vmem>>, %arg2: memref<128x256xbf16, #tpu.memory_space<vmem>>, %arg3: memref<256x128xbf16, #tpu.memory_space<vmem>>, %arg4: memref<1x256xf32, #tpu.memory_space<vmem>>, %arg5: memref<1x128xf32, #tpu.memory_space<vmem>>, %arg6: memref<4x8x128xf32, #tpu.memory_space<vmem>>, %arg7: memref<3x8x256xf32, #tpu.memory_space<vmem>>, %arg8: memref<8x256xf32, #tpu.memory_space<vmem>>, %arg9: memref<8x128xf32, #tpu.memory_space<vmem>>) attributes {dimension_semantics = [#tpu.dimension_semantics<parallel>], iteration_bounds = array<i64: 1>, scalar_prefetch = 0 : i64, scratch_operands = 0 : i64, tpu.core_type = #tpu.core_type<tc>, window_params = [{transform_indices = @transform_0, window_bounds = array<i64: 8, 256>}, {pipeline_mode = #tpu.pipeline_mode<synchronous>, transform_indices = @transform_1, window_bounds = array<i64: 128, 256>}, {pipeline_mode = #tpu.pipeline_mode<synchronous>, transform_indices = @transform_2, window_bounds = array<i64: 256, 128>}, {pipeline_mode = #tpu.pipeline_mode<synchronous>, transform_indices = @transform_3, window_bounds = array<i64: 1, 256>}, {pipeline_mode = #tpu.pipeline_mode<synchronous>, transform_indices = @transform_4, window_bounds = array<i64: 1, 128>}, {transform_indices = @transform_5, window_bounds = array<i64: 4, 8, 128>}, {transform_indices = @transform_6, window_bounds = array<i64: 3, 8, 256>}, {transform_indices = @transform_7, window_bounds = array<i64: 8, 256>}, {transform_indices = @transform_8, window_bounds = array<i64: 8, 128>}]} {
    %c0 = arith.constant 0 : index
    %c0_0 = arith.constant 0 : index
    %0 = vector.load %arg2[%c0, %c0_0] : memref<128x256xbf16, #tpu.memory_space<vmem>>, vector<128x256xbf16>
    %c0_1 = arith.constant 0 : index
    %c0_2 = arith.constant 0 : index
    %1 = vector.load %arg3[%c0_1, %c0_2] : memref<256x128xbf16, #tpu.memory_space<vmem>>, vector<256x128xbf16>
    %c0_3 = arith.constant 0 : index
    %c0_4 = arith.constant 0 : index
    %2 = vector.load %arg4[%c0_3, %c0_4] : memref<1x256xf32, #tpu.memory_space<vmem>>, vector<1x256xf32>
    %3 = vector.shape_cast %2 : vector<1x256xf32> to vector<1x256xf32>
    %4 = vector.broadcast %3 : vector<1x256xf32> to vector<8x256xf32>
    %c0_5 = arith.constant 0 : index
    %c0_6 = arith.constant 0 : index
    %5 = vector.load %arg5[%c0_5, %c0_6] : memref<1x128xf32, #tpu.memory_space<vmem>>, vector<1x128xf32>
    %6 = vector.shape_cast %5 : vector<1x128xf32> to vector<1x128xf32>
    %7 = vector.broadcast %6 : vector<1x128xf32> to vector<8x128xf32>
    %c0_7 = arith.constant 0 : index
    %c0_8 = arith.constant 0 : index
    %8 = vector.load %arg1[%c0_7, %c0_8] : memref<8x256xf32, #tpu.memory_space<vmem>>, vector<8x256xf32>
    %9 = arith.truncf %8 : vector<8x256xf32> to vector<8x256xbf16>
    %c0_9 = arith.constant 0 : index
    %c0_10 = arith.constant 0 : index
    %c0_11 = arith.constant 0 : index
    %10 = vector.load %arg6[%c0_9, %c0_10, %c0_11] : memref<4x8x128xf32, #tpu.memory_space<vmem>>, vector<1x8x128xf32>
    %11 = vector.shape_cast %10 : vector<1x8x128xf32> to vector<8x128xf32>
    %cst = arith.constant dense<0.000000e+00> : vector<8x128xf32>
    %12 = tpu.matmul %9, %1, %cst {dimension_numbers = #tpu.dot_dimension_numbers<[1], [0], [0], [1], [0, 0, 1, 1], [], []>} : vector<8x256xbf16>, vector<256x128xbf16>, vector<8x128xf32> -> vector<8x128xf32>
    %13 = arith.addf %12, %7 : vector<8x128xf32>
    %14 = arith.negf %13 : vector<8x128xf32>
    %15 = math.exp %14 : vector<8x128xf32>
    %cst_12 = arith.constant 1.000000e+00 : f32
    %16 = vector.broadcast %cst_12 : f32 to vector<8x128xf32>
    %17 = arith.addf %16, %15 : vector<8x128xf32>
    %18 = arith.divf %16, %17 : vector<8x128xf32>
    %19 = arith.cmpf ogt, %18, %11 : vector<8x128xf32>
    %20 = arith.extui %19 : vector<8x128xi1> to vector<8x128xi32>
    %21 = arith.sitofp %20 : vector<8x128xi32> to vector<8x128xf32>
    %22 = arith.truncf %21 : vector<8x128xf32> to vector<8x128xbf16>
    %c0_i32 = arith.constant 0 : i32
    %23 = arith.index_cast %c0_i32 : i32 to index
    %c0_13 = arith.constant 0 : index
    %c0_14 = arith.constant 0 : index
    %24 = vector.load %arg7[%23, %c0_13, %c0_14] : memref<3x8x256xf32, #tpu.memory_space<vmem>>, vector<1x8x256xf32>
    %25 = vector.shape_cast %24 : vector<1x8x256xf32> to vector<8x256xf32>
    %cst_15 = arith.constant dense<0.000000e+00> : vector<8x256xf32>
    %26 = tpu.matmul %22, %0, %cst_15 {dimension_numbers = #tpu.dot_dimension_numbers<[1], [0], [0], [1], [0, 0, 1, 1], [], []>} : vector<8x128xbf16>, vector<128x256xbf16>, vector<8x256xf32> -> vector<8x256xf32>
    %27 = arith.addf %26, %4 : vector<8x256xf32>
    %28 = arith.negf %27 : vector<8x256xf32>
    %29 = math.exp %28 : vector<8x256xf32>
    %cst_16 = arith.constant 1.000000e+00 : f32
    %30 = vector.broadcast %cst_16 : f32 to vector<8x256xf32>
    %31 = arith.addf %30, %29 : vector<8x256xf32>
    %32 = arith.divf %30, %31 : vector<8x256xf32>
    %33 = arith.cmpf ogt, %32, %25 : vector<8x256xf32>
    %34 = arith.extui %33 : vector<8x256xi1> to vector<8x256xi32>
    %35 = arith.sitofp %34 : vector<8x256xi32> to vector<8x256xf32>
    %36 = arith.truncf %35 : vector<8x256xf32> to vector<8x256xbf16>
    %c1_i32 = arith.constant 1 : i32
    %37 = arith.addi %c0_i32, %c1_i32 : i32
    %38 = arith.index_cast %37 : i32 to index
    %c0_17 = arith.constant 0 : index
    %c0_18 = arith.constant 0 : index
    %39 = vector.load %arg6[%38, %c0_17, %c0_18] : memref<4x8x128xf32, #tpu.memory_space<vmem>>, vector<1x8x128xf32>
    %40 = vector.shape_cast %39 : vector<1x8x128xf32> to vector<8x128xf32>
    %cst_19 = arith.constant dense<0.000000e+00> : vector<8x128xf32>
    %41 = tpu.matmul %36, %1, %cst_19 {dimension_numbers = #tpu.dot_dimension_numbers<[1], [0], [0], [1], [0, 0, 1, 1], [], []>} : vector<8x256xbf16>, vector<256x128xbf16>, vector<8x128xf32> -> vector<8x128xf32>
    %42 = arith.addf %41, %7 : vector<8x128xf32>
    %43 = arith.negf %42 : vector<8x128xf32>
    %44 = math.exp %43 : vector<8x128xf32>
    %cst_20 = arith.constant 1.000000e+00 : f32
    %45 = vector.broadcast %cst_20 : f32 to vector<8x128xf32>
    %46 = arith.addf %45, %44 : vector<8x128xf32>
    %47 = arith.divf %45, %46 : vector<8x128xf32>
    %48 = arith.cmpf ogt, %47, %40 : vector<8x128xf32>
    %49 = arith.extui %48 : vector<8x128xi1> to vector<8x128xi32>
    %50 = arith.sitofp %49 : vector<8x128xi32> to vector<8x128xf32>
    %51 = arith.truncf %50 : vector<8x128xf32> to vector<8x128xbf16>
    %c1_i32_21 = arith.constant 1 : i32
    %52 = arith.index_cast %c1_i32_21 : i32 to index
    %c0_22 = arith.constant 0 : index
    %c0_23 = arith.constant 0 : index
    %53 = vector.load %arg7[%52, %c0_22, %c0_23] : memref<3x8x256xf32, #tpu.memory_space<vmem>>, vector<1x8x256xf32>
    %54 = vector.shape_cast %53 : vector<1x8x256xf32> to vector<8x256xf32>
    %cst_24 = arith.constant dense<0.000000e+00> : vector<8x256xf32>
    %55 = tpu.matmul %51, %0, %cst_24 {dimension_numbers = #tpu.dot_dimension_numbers<[1], [0], [0], [1], [0, 0, 1, 1], [], []>} : vector<8x128xbf16>, vector<128x256xbf16>, vector<8x256xf32> -> vector<8x256xf32>
    %56 = arith.addf %55, %4 : vector<8x256xf32>
    %57 = arith.negf %56 : vector<8x256xf32>
    %58 = math.exp %57 : vector<8x256xf32>
    %cst_25 = arith.constant 1.000000e+00 : f32
    %59 = vector.broadcast %cst_25 : f32 to vector<8x256xf32>
    %60 = arith.addf %59, %58 : vector<8x256xf32>
    %61 = arith.divf %59, %60 : vector<8x256xf32>
    %62 = arith.cmpf ogt, %61, %54 : vector<8x256xf32>
    %63 = arith.extui %62 : vector<8x256xi1> to vector<8x256xi32>
    %64 = arith.sitofp %63 : vector<8x256xi32> to vector<8x256xf32>
    %65 = arith.truncf %64 : vector<8x256xf32> to vector<8x256xbf16>
    %c1_i32_26 = arith.constant 1 : i32
    %66 = arith.addi %c1_i32_21, %c1_i32_26 : i32
    %67 = arith.index_cast %66 : i32 to index
    %c0_27 = arith.constant 0 : index
    %c0_28 = arith.constant 0 : index
    %68 = vector.load %arg6[%67, %c0_27, %c0_28] : memref<4x8x128xf32, #tpu.memory_space<vmem>>, vector<1x8x128xf32>
    %69 = vector.shape_cast %68 : vector<1x8x128xf32> to vector<8x128xf32>
    %cst_29 = arith.constant dense<0.000000e+00> : vector<8x128xf32>
    %70 = tpu.matmul %65, %1, %cst_29 {dimension_numbers = #tpu.dot_dimension_numbers<[1], [0], [0], [1], [0, 0, 1, 1], [], []>} : vector<8x256xbf16>, vector<256x128xbf16>, vector<8x128xf32> -> vector<8x128xf32>
    %71 = arith.addf %70, %7 : vector<8x128xf32>
    %72 = arith.negf %71 : vector<8x128xf32>
    %73 = math.exp %72 : vector<8x128xf32>
    %cst_30 = arith.constant 1.000000e+00 : f32
    %74 = vector.broadcast %cst_30 : f32 to vector<8x128xf32>
    %75 = arith.addf %74, %73 : vector<8x128xf32>
    %76 = arith.divf %74, %75 : vector<8x128xf32>
    %77 = arith.cmpf ogt, %76, %69 : vector<8x128xf32>
    %78 = arith.extui %77 : vector<8x128xi1> to vector<8x128xi32>
    %79 = arith.sitofp %78 : vector<8x128xi32> to vector<8x128xf32>
    %80 = arith.truncf %79 : vector<8x128xf32> to vector<8x128xbf16>
    %c2_i32 = arith.constant 2 : i32
    %81 = arith.index_cast %c2_i32 : i32 to index
    %c0_31 = arith.constant 0 : index
    %c0_32 = arith.constant 0 : index
    %82 = vector.load %arg7[%81, %c0_31, %c0_32] : memref<3x8x256xf32, #tpu.memory_space<vmem>>, vector<1x8x256xf32>
    %83 = vector.shape_cast %82 : vector<1x8x256xf32> to vector<8x256xf32>
    %cst_33 = arith.constant dense<0.000000e+00> : vector<8x256xf32>
    %84 = tpu.matmul %80, %0, %cst_33 {dimension_numbers = #tpu.dot_dimension_numbers<[1], [0], [0], [1], [0, 0, 1, 1], [], []>} : vector<8x128xbf16>, vector<128x256xbf16>, vector<8x256xf32> -> vector<8x256xf32>
    %85 = arith.addf %84, %4 : vector<8x256xf32>
    %86 = arith.negf %85 : vector<8x256xf32>
    %87 = math.exp %86 : vector<8x256xf32>
    %cst_34 = arith.constant 1.000000e+00 : f32
    %88 = vector.broadcast %cst_34 : f32 to vector<8x256xf32>
    %89 = arith.addf %88, %87 : vector<8x256xf32>
    %90 = arith.divf %88, %89 : vector<8x256xf32>
    %91 = arith.cmpf ogt, %90, %83 : vector<8x256xf32>
    %92 = arith.extui %91 : vector<8x256xi1> to vector<8x256xi32>
    %93 = arith.sitofp %92 : vector<8x256xi32> to vector<8x256xf32>
    %94 = arith.truncf %93 : vector<8x256xf32> to vector<8x256xbf16>
    %c1_i32_35 = arith.constant 1 : i32
    %95 = arith.addi %c2_i32, %c1_i32_35 : i32
    %96 = arith.index_cast %95 : i32 to index
    %c0_36 = arith.constant 0 : index
    %c0_37 = arith.constant 0 : index
    %97 = vector.load %arg6[%96, %c0_36, %c0_37] : memref<4x8x128xf32, #tpu.memory_space<vmem>>, vector<1x8x128xf32>
    %98 = vector.shape_cast %97 : vector<1x8x128xf32> to vector<8x128xf32>
    %cst_38 = arith.constant dense<0.000000e+00> : vector<8x128xf32>
    %99 = tpu.matmul %94, %1, %cst_38 {dimension_numbers = #tpu.dot_dimension_numbers<[1], [0], [0], [1], [0, 0, 1, 1], [], []>} : vector<8x256xbf16>, vector<256x128xbf16>, vector<8x128xf32> -> vector<8x128xf32>
    %100 = arith.addf %99, %7 : vector<8x128xf32>
    %101 = arith.negf %100 : vector<8x128xf32>
    %102 = math.exp %101 : vector<8x128xf32>
    %cst_39 = arith.constant 1.000000e+00 : f32
    %103 = vector.broadcast %cst_39 : f32 to vector<8x128xf32>
    %104 = arith.addf %103, %102 : vector<8x128xf32>
    %105 = arith.divf %103, %104 : vector<8x128xf32>
    %106 = arith.cmpf ogt, %105, %98 : vector<8x128xf32>
    %107 = arith.extui %106 : vector<8x128xi1> to vector<8x128xi32>
    %108 = arith.sitofp %107 : vector<8x128xi32> to vector<8x128xf32>
    %109 = arith.truncf %108 : vector<8x128xf32> to vector<8x128xbf16>
    %c3_i32 = arith.constant 3 : i32
    %110 = arith.extf %94 : vector<8x256xbf16> to vector<8x256xf32>
    %c0_40 = arith.constant 0 : index
    %c0_41 = arith.constant 0 : index
    %111 = vector.load %arg8[%c0_40, %c0_41] : memref<8x256xf32, #tpu.memory_space<vmem>>, vector<8x256xf32>
    tpu.vector_store %arg8[%c0_40, %c0_41], %110 {strides = array<i32>} : memref<8x256xf32, #tpu.memory_space<vmem>>, vector<8x256xf32>,
    %112 = arith.extf %109 : vector<8x128xbf16> to vector<8x128xf32>
    %c0_42 = arith.constant 0 : index
    %c0_43 = arith.constant 0 : index
    %113 = vector.load %arg9[%c0_42, %c0_43] : memref<8x128xf32, #tpu.memory_space<vmem>>, vector<8x128xf32>
    tpu.vector_store %arg9[%c0_42, %c0_43], %112 {strides = array<i32>} : memref<8x128xf32, #tpu.memory_space<vmem>>, vector<8x128xf32>,
    return
  }
  func.func @transform_0(%arg0: i32) -> (i32, i32) {
    %c0_i32 = arith.constant 0 : i32
    %c0_i32_0 = arith.constant 0 : i32
    return %arg0, %c0_i32 : i32, i32
  }
  func.func @transform_1(%arg0: i32) -> (i32, i32) {
    %c0_i32 = arith.constant 0 : i32
    %c0_i32_0 = arith.constant 0 : i32
    %c0_i32_1 = arith.constant 0 : i32
    return %c0_i32, %c0_i32_0 : i32, i32
  }
  func.func @transform_2(%arg0: i32) -> (i32, i32) {
    %c0_i32 = arith.constant 0 : i32
    %c0_i32_0 = arith.constant 0 : i32
    %c0_i32_1 = arith.constant 0 : i32
    return %c0_i32, %c0_i32_0 : i32, i32
  }
  func.func @transform_3(%arg0: i32) -> (i32, i32) {
    %c0_i32 = arith.constant 0 : i32
    %c0_i32_0 = arith.constant 0 : i32
    %c0_i32_1 = arith.constant 0 : i32
    return %c0_i32, %c0_i32_0 : i32, i32
  }
  func.func @transform_4(%arg0: i32) -> (i32, i32) {
    %c0_i32 = arith.constant 0 : i32
    %c0_i32_0 = arith.constant 0 : i32
    %c0_i32_1 = arith.constant 0 : i32
    return %c0_i32, %c0_i32_0 : i32, i32
  }
  func.func @transform_5(%arg0: i32) -> (i32, i32, i32) {
    %c0_i32 = arith.constant 0 : i32
    %c0_i32_0 = arith.constant 0 : i32
    %c0_i32_1 = arith.constant 0 : i32
    return %c0_i32, %arg0, %c0_i32_0 : i32, i32, i32
  }
  func.func @transform_6(%arg0: i32) -> (i32, i32, i32) {
    %c0_i32 = arith.constant 0 : i32
    %c0_i32_0 = arith.constant 0 : i32
    %c0_i32_1 = arith.constant 0 : i32
    return %c0_i32, %arg0, %c0_i32_0 : i32, i32, i32
  }
  func.func @transform_7(%arg0: i32) -> (i32, i32) {
    %c0_i32 = arith.constant 0 : i32
    %c0_i32_0 = arith.constant 0 : i32
    return %arg0, %c0_i32 : i32, i32
  }
  func.func @transform_8(%arg0: i32) -> (i32, i32) {
    %c0_i32 = arith.constant 0 : i32
    %c0_i32_0 = arith.constant 0 : i32
    return %arg0, %c0_i32 : i32, i32
  }
}

</mosaic_0001>

<llo_original>
// kernel: tpu_custom_call.1
$region0: #{tpu_custom_call.1}
  #allocation0 [shape = 'u32[]', space=smem, size = 0x4, offset = 0x4, fixed_abs, tag = 'smem constant byte address 0x4 - core index']
  #allocation1 [shape = 'u32[144,128]{1,0:T(1,128)}', space=vmem, size = 0x12000, scoped, tag = 'internal scratch']
  %s0 = inlined_call_operand.hbm [shape: f32[8,256], index: 0, kind: input, shape index: {}]
  %s1 = inlined_call_operand.hbm [shape: bf16[128,256], index: 1, kind: input, shape index: {}]
  %s2 = inlined_call_operand.hbm [shape: bf16[256,128], index: 2, kind: input, shape index: {}]
  %s3 = inlined_call_operand.vmem [shape: f32[1,256], index: 3, kind: input, shape index: {}]
  %s4 = inlined_call_operand.vmem [shape: f32[1,128], index: 4, kind: input, shape index: {}]
  %s5 = inlined_call_operand.hbm [shape: f32[4,8,128], index: 5, kind: input, shape index: {}]
  %s6 = inlined_call_operand.hbm [shape: f32[3,8,256], index: 6, kind: input, shape index: {}]
  %s7 = inlined_call_operand.hbm [shape: f32[8,256], index: 7, kind: output, shape index: {0}]
  %s8 = inlined_call_operand.hbm [shape: f32[8,128], index: 8, kind: output, shape index: {1}]
  %9 = xla_tuple %s7, %s8
  %s10 = sld [smem:[#allocation0]]
  $region66: #{tpu_custom_call.1} parent=0
    _
  %s12 = ssub.s32 1, %s10
  %s13 = scalar_select 0, %s12, %s10
  $region1: #{tpu_custom_call.1} parent=0
    #allocation2 [shape = 'u8[8192]{0}', space=vmem, size = 0x2000, scoped, tag = 'input window, operand 0, single buffered']
    #allocation3 [shape = 's32[1]{0}', space=sflag, size = 0x4, scoped, tag = 'scoped memory for tpu_custom_call.1']
    #allocation4 [shape = 's32[1]{0}', space=sflag, size = 0x4, scoped, tag = 'scoped memory for tpu_custom_call.1']
    #allocation5 [shape = 'u8[65536]{0}', space=vmem, size = 0x10000, scoped, tag = 'input window, operand 1, single buffered']
    #allocation6 [shape = 's32[1]{0}', space=sflag, size = 0x4, scoped, tag = 'scoped memory for tpu_custom_call.1']
    #allocation7 [shape = 'u8[65536]{0}', space=vmem, size = 0x10000, scoped, tag = 'input window, operand 2, single buffered']
    #allocation8 [shape = 'u8[16384]{0}', space=vmem, size = 0x4000, scoped, tag = 'input window, operand 5, single buffered']
    #allocation9 [shape = 's32[1]{0}', space=sflag, size = 0x4, scoped, tag = 'scoped memory for tpu_custom_call.1']
    #allocation10 [shape = 'u8[24576]{0}', space=vmem, size = 0x6000, scoped, tag = 'input window, operand 6, single buffered']
    #allocation11 [shape = 'u8[8192]{0}', space=vmem, size = 0x2000, scoped, tag = 'output window, operand 0, single buffered']
    #allocation12 [shape = 'u8[4096]{0}', space=vmem, size = 0x1000, scoped, tag = 'output window, operand 1, single buffered']
    #allocation13 [shape = 's32[1]{0}', space=sflag, size = 0x4, scoped, tag = 'scoped memory for tpu_custom_call.1']
    %14 = vsyncpa [#allocation3], 0
    %15 = vsyncpa [#allocation6], 0
    %16 = vsyncpa [#allocation9], 0
    %17 = vsyncpa [#allocation4], 0
    %18 = vsyncpa [#allocation13], 0
    // Predicated region
    $region2: #{tpu_custom_call.1} parent=1 // pred_check
      _
    $region3: #{tpu_custom_call.1} parent=1 // pred_check_branch
      %20 = sbr.rel (0) target = $region5
    $region4: #{tpu_custom_call.1} parent=1 // pred_region
      %s22 = ssub.s32 256, 256
      %23 = vsyncadd [#allocation3], %s22
      %s25 = sshll.u32 [#allocation2], 4
      %s26 = int_to_ptr.vmem [resolvable:$true] %s25
      %28 = dma.hbm_to_vmem [thread:$0]  %s0, 256, %s26, [#allocation3]
    $region5: #{tpu_custom_call.1} parent=1 // pred_fallthru
      _
    // Predicated region
    $region6: #{tpu_custom_call.1} parent=1 // pred_check
      _
    $region7: #{tpu_custom_call.1} parent=1 // pred_check_branch
      %30 = sbr.rel (0) target = $region9
    $region8: #{tpu_custom_call.1} parent=1 // pred_region
      %s32 = ssub.s32 2048, 2048
      %33 = vsyncadd [#allocation6], %s32
      %s34 = sshll.u32 [#allocation5], 4
      %s35 = int_to_ptr.vmem [resolvable:$true] %s34
      %40 = dma.hbm_to_vmem [thread:$0]  %s1, 2048, %s35, [#allocation6], 128, 128, 8
    $region9: #{tpu_custom_call.1} parent=1 // pred_fallthru
      _
    // Predicated region
    $region10: #{tpu_custom_call.1} parent=1 // pred_check
      _
    $region11: #{tpu_custom_call.1} parent=1 // pred_check_branch
      %42 = sbr.rel (0) target = $region13
    $region12: #{tpu_custom_call.1} parent=1 // pred_region
      %s44 = ssub.s32 2048, 2048
      %45 = vsyncadd [#allocation6], %s44
      %s46 = sshll.u32 [#allocation7], 4
      %s47 = int_to_ptr.vmem [resolvable:$true] %s46
      %52 = dma.hbm_to_vmem [thread:$0]  %s2, 2048, %s47, [#allocation6], 64, 64, 4
    $region13: #{tpu_custom_call.1} parent=1 // pred_fallthru
      _
    // Predicated region
    $region14: #{tpu_custom_call.1} parent=1 // pred_check
      _
    $region15: #{tpu_custom_call.1} parent=1 // pred_check_branch
      %54 = sbr.rel (0) target = $region17
    $region16: #{tpu_custom_call.1} parent=1 // pred_region
      _
    $region17: #{tpu_custom_call.1} parent=1 // pred_fallthru
      _
    // Predicated region
    $region18: #{tpu_custom_call.1} parent=1 // pred_check
      _
    $region19: #{tpu_custom_call.1} parent=1 // pred_check_branch
      %56 = sbr.rel (0) target = $region21
    $region20: #{tpu_custom_call.1} parent=1 // pred_region
      _
    $region21: #{tpu_custom_call.1} parent=1 // pred_fallthru
      _
    // Predicated region
    $region22: #{tpu_custom_call.1} parent=1 // pred_check
      _
    $region23: #{tpu_custom_call.1} parent=1 // pred_check_branch
      %58 = sbr.rel (0) target = $region25
    $region24: #{tpu_custom_call.1} parent=1 // pred_region
      %s60 = ssub.s32 512, 512
      %61 = vsyncadd [#allocation9], %s60
      %s62 = sshll.u32 [#allocation8], 4
      %s63 = int_to_ptr.vmem [resolvable:$true] %s62
      %68 = dma.hbm_to_vmem [thread:$0]  %s5, 512, %s63, [#allocation9], 128, 128, 8
    $region25: #{tpu_custom_call.1} parent=1 // pred_fallthru
      _
    // Predicated region
    $region26: #{tpu_custom_call.1} parent=1 // pred_check
      _
    $region27: #{tpu_custom_call.1} parent=1 // pred_check_branch
      %70 = sbr.rel (0) target = $region29
    $region28: #{tpu_custom_call.1} parent=1 // pred_region
      %s72 = ssub.s32 768, 768
      %73 = vsyncadd [#allocation9], %s72
      %s74 = sshll.u32 [#allocation10], 4
      %s75 = int_to_ptr.vmem [resolvable:$true] %s74
      %80 = dma.hbm_to_vmem [thread:$0]  %s6, 768, %s75, [#allocation9], 256, 256, 16
    $region29: #{tpu_custom_call.1} parent=1 // pred_fallthru
      _
    // Predicated region
    $region30: #{tpu_custom_call.1} parent=1 // pred_check
      _
    $region31: #{tpu_custom_call.1} parent=1 // pred_check_branch
      %82 = sbr.rel (0) target = $region33
    $region32: #{tpu_custom_call.1} parent=1 // pred_region
      %83 = dma.done [#allocation3], 256
    $region33: #{tpu_custom_call.1} parent=1 // pred_fallthru
      _
    // Predicated region
    $region34: #{tpu_custom_call.1} parent=1 // pred_check
      _
    $region35: #{tpu_custom_call.1} parent=1 // pred_check_branch
      %85 = sbr.rel (0) target = $region37
    $region36: #{tpu_custom_call.1} parent=1 // pred_region
      %86 = dma.done [#allocation6], 2048
    $region37: #{tpu_custom_call.1} parent=1 // pred_fallthru
      _
    // Predicated region
    $region38: #{tpu_custom_call.1} parent=1 // pred_check
      _
    $region39: #{tpu_custom_call.1} parent=1 // pred_check_branch
      %88 = sbr.rel (0) target = $region41
    $region40: #{tpu_custom_call.1} parent=1 // pred_region
      %89 = dma.done [#allocation6], 2048
    $region41: #{tpu_custom_call.1} parent=1 // pred_fallthru
      _
    // Predicated region
    $region42: #{tpu_custom_call.1} parent=1 // pred_check
      _
    $region43: #{tpu_custom_call.1} parent=1 // pred_check_branch
      %91 = sbr.rel (0) target = $region45
    $region44: #{tpu_custom_call.1} parent=1 // pred_region
      %92 = dma.done [#allocation9], 512
    $region45: #{tpu_custom_call.1} parent=1 // pred_fallthru
      _
    // Predicated region
    $region46: #{tpu_custom_call.1} parent=1 // pred_check
      _
    $region47: #{tpu_custom_call.1} parent=1 // pred_check_branch
      %94 = sbr.rel (0) target = $region49
    $region48: #{tpu_custom_call.1} parent=1 // pred_region
      %95 = dma.done [#allocation9], 768
    $region49: #{tpu_custom_call.1} parent=1 // pred_fallthru
      _
    %v97 = vld [vmem:[#allocation5] sm:$0xff]
    %v98 = vld [vmem:[#allocation5 + $0x8] sm:$0xff]
    %v99 = vld [vmem:[#allocation5 + $0x10] sm:$0xff]
    %v100 = vld [vmem:[#allocation5 + $0x18] sm:$0xff]
    %v101 = vld [vmem:[#allocation5 + $0x20] sm:$0xff]
    %v102 = vld [vmem:[#allocation5 + $0x28] sm:$0xff]
    %v103 = vld [vmem:[#allocation5 + $0x30] sm:$0xff]
    %v104 = vld [vmem:[#allocation5 + $0x38] sm:$0xff]
    %v105 = vld [vmem:[#allocation5 + $0x40] sm:$0xff]
    %v106 = vld [vmem:[#allocation5 + $0x48] sm:$0xff]
    %v107 = vld [vmem:[#allocation5 + $0x50] sm:$0xff]
    %v108 = vld [vmem:[#allocation5 + $0x58] sm:$0xff]
    %v109 = vld [vmem:[#allocation5 + $0x60] sm:$0xff]
    %v110 = vld [vmem:[#allocation5 + $0x68] sm:$0xff]
    %v111 = vld [vmem:[#allocation5 + $0x70] sm:$0xff]
    %v112 = vld [vmem:[#allocation5 + $0x78] sm:$0xff]
    %v113 = vld [vmem:[#allocation7] sm:$0xf]
    %v114 = vld [vmem:[#allocation7 + $0x4] sm:$0xf]
    %v115 = vld [vmem:[#allocation7 + $0x8] sm:$0xf]
    %v116 = vld [vmem:[#allocation7 + $0xc] sm:$0xf]
    %v117 = vld [vmem:[#allocation7 + $0x10] sm:$0xf]
    %v118 = vld [vmem:[#allocation7 + $0x14] sm:$0xf]
    %v119 = vld [vmem:[#allocation7 + $0x18] sm:$0xf]
    %v120 = vld [vmem:[#allocation7 + $0x1c] sm:$0xf]
    %v121 = vld [vmem:[#allocation7 + $0x20] sm:$0xf]
    %v122 = vld [vmem:[#allocation7 + $0x24] sm:$0xf]
    %v123 = vld [vmem:[#allocation7 + $0x28] sm:$0xf]
    %v124 = vld [vmem:[#allocation7 + $0x2c] sm:$0xf]
    %v125 = vld [vmem:[#allocation7 + $0x30] sm:$0xf]
    %v126 = vld [vmem:[#allocation7 + $0x34] sm:$0xf]
    %v127 = vld [vmem:[#allocation7 + $0x38] sm:$0xf]
    %v128 = vld [vmem:[#allocation7 + $0x3c] sm:$0xf]
    %v129 = vld [vmem:[#allocation7 + $0x40] sm:$0xf]
    %v130 = vld [vmem:[#allocation7 + $0x44] sm:$0xf]
    %v131 = vld [vmem:[#allocation7 + $0x48] sm:$0xf]
    %v132 = vld [vmem:[#allocation7 + $0x4c] sm:$0xf]
    %v133 = vld [vmem:[#allocation7 + $0x50] sm:$0xf]
    %v134 = vld [vmem:[#allocation7 + $0x54] sm:$0xf]
    %v135 = vld [vmem:[#allocation7 + $0x58] sm:$0xf]
    %v136 = vld [vmem:[#allocation7 + $0x5c] sm:$0xf]
    %v137 = vld [vmem:[#allocation7 + $0x60] sm:$0xf]
    %v138 = vld [vmem:[#allocation7 + $0x64] sm:$0xf]
    %v139 = vld [vmem:[#allocation7 + $0x68] sm:$0xf]
    %v140 = vld [vmem:[#allocation7 + $0x6c] sm:$0xf]
    %v141 = vld [vmem:[#allocation7 + $0x70] sm:$0xf]
    %v142 = vld [vmem:[#allocation7 + $0x74] sm:$0xf]
    %v143 = vld [vmem:[#allocation7 + $0x78] sm:$0xf]
    %v144 = vld [vmem:[#allocation7 + $0x7c] sm:$0xf]
    %v145 = vld [vmem:[%s3] sm:$0x3]
    %v147 = vlaneseq
    %v148 = vshrl.u32 %v147, 7
    %v149 = vsub.s32 0, %v148
    %v150 = vrot.slane %v145, %v149
    %v151 = vlaneseq
    %v152 = vshrl.u32 %v151, 7
    %v153 = vsub.s32 1, %v152
    %v154 = vrot.slane %v145, %v153
    %v157 = vld [vmem:[%s4] sm:$0x1]
    %v159 = vlaneseq
    %v160 = vshrl.u32 %v159, 7
    %v161 = vsub.s32 0, %v160
    %v162 = vrot.slane %v157, %v161
    %v164 = vld [vmem:[#allocation2] sm:$0xff]
    %v165 = vld [vmem:[#allocation2 + $0x8] sm:$0xff]
    %v166 = vpack.c.bf16 %v164, %v164
    %v167 = vpack.c.bf16 %v165, %v165
    %v168 = vld [vmem:[#allocation8] sm:$0xff]
    %v201 = vunpack.c.l.b16 %v113
    %v202 = vunpack.c.l.b16 %v114
    %v203 = vunpack.c.l.b16 %v115
    %v204 = vunpack.c.l.b16 %v116
    %v205 = vunpack.c.l.b16 %v117
    %v206 = vunpack.c.l.b16 %v118
    %v207 = vunpack.c.l.b16 %v119
    %v208 = vunpack.c.l.b16 %v120
    %v209 = vunpack.c.l.b16 %v121
    %v210 = vunpack.c.l.b16 %v122
    %v211 = vunpack.c.l.b16 %v123
    %v212 = vunpack.c.l.b16 %v124
    %v213 = vunpack.c.l.b16 %v125
    %v214 = vunpack.c.l.b16 %v126
    %v215 = vunpack.c.l.b16 %v127
    %v216 = vunpack.c.l.b16 %v128
    %v217 = vunpack.c.l.b16 %v129
    %v218 = vunpack.c.l.b16 %v130
    %v219 = vunpack.c.l.b16 %v131
    %v220 = vunpack.c.l.b16 %v132
    %v221 = vunpack.c.l.b16 %v133
    %v222 = vunpack.c.l.b16 %v134
    %v223 = vunpack.c.l.b16 %v135
    %v224 = vunpack.c.l.b16 %v136
    %v225 = vunpack.c.l.b16 %v137
    %v226 = vunpack.c.l.b16 %v138
    %v227 = vunpack.c.l.b16 %v139
    %v228 = vunpack.c.l.b16 %v140
    %v229 = vunpack.c.l.b16 %v141
    %v230 = vunpack.c.l.b16 %v142
    %v231 = vunpack.c.l.b16 %v143
    %v232 = vunpack.c.l.b16 %v144
    %v233 = vpack.c.b16 %v202, %v201
    %v234 = vpack.c.b16 %v204, %v203
    %v235 = vpack.c.b16 %v206, %v205
    %v236 = vpack.c.b16 %v208, %v207
    %v237 = vpack.c.b16 %v210, %v209
    %v238 = vpack.c.b16 %v212, %v211
    %v239 = vpack.c.b16 %v214, %v213
    %v240 = vpack.c.b16 %v216, %v215
    %v241 = vpack.c.b16 %v218, %v217
    %v242 = vpack.c.b16 %v220, %v219
    %v243 = vpack.c.b16 %v222, %v221
    %v244 = vpack.c.b16 %v224, %v223
    %v245 = vpack.c.b16 %v226, %v225
    %v246 = vpack.c.b16 %v228, %v227
    %v247 = vpack.c.b16 %v230, %v229
    %v248 = vpack.c.b16 %v232, %v231
    %265 = vmatprep.subr.bf16.mxu0 0
    %266 = vmatpush1.bf16.msra.mxu0 %v240
    %267 = vmatprep.subr.bf16.mxu0 0
    %268 = vmatpush1.bf16.msra.mxu0 %v239
    %269 = vmatprep.subr.bf16.mxu0 0
    %270 = vmatpush1.bf16.msra.mxu0 %v238
    %271 = vmatprep.subr.bf16.mxu0 0
    %272 = vmatpush1.bf16.msra.mxu0 %v237
    %273 = vmatprep.subr.bf16.mxu0 0
    %274 = vmatpush1.bf16.msra.mxu0 %v236
    %275 = vmatprep.subr.bf16.mxu0 0
    %276 = vmatpush1.bf16.msra.mxu0 %v235
    %277 = vmatprep.subr.bf16.mxu0 0
    %278 = vmatpush1.bf16.msra.mxu0 %v234
    %279 = vmatprep.subr.bf16.mxu0 0
    %280 = vmatpush1.bf16.msra.mxu0 %v233
    %281 = vmatprep.subr.bf16.mxu0 0
    %282 = vmatpush2.bf16.msra.mxu0 %v248
    %283 = vmatprep.subr.bf16.mxu0 0
    %284 = vmatpush2.bf16.msra.mxu0 %v247
    %285 = vmatprep.subr.bf16.mxu0 0
    %286 = vmatpush2.bf16.msra.mxu0 %v246
    %287 = vmatprep.subr.bf16.mxu0 0
    %288 = vmatpush2.bf16.msra.mxu0 %v245
    %289 = vmatprep.subr.bf16.mxu0 0
    %290 = vmatpush2.bf16.msra.mxu0 %v244
    %291 = vmatprep.subr.bf16.mxu0 0
    %292 = vmatpush2.bf16.msra.mxu0 %v243
    %293 = vmatprep.subr.bf16.mxu0 0
    %294 = vmatpush2.bf16.msra.mxu0 %v242
    %295 = vmatprep.subr.bf16.mxu0 0
    %296 = vmatpush2.bf16.msra.mxu0 %v241
    %297 = vmatprep.mubr.bf16.mxu0 %v167
    %298 = vmatmul.mubr.bf16.gmra.mxu0 %v166
    %v299 = vpop.f32.mrf.mxu0
    %v300 = vadd.f32 %v162, %v299
    %v301 = vpop.f32.mrf.mxu0
    %v302 = vpop.f32.mrf.mxu0
    %v303 = vpop.f32.mrf.mxu0
    %304 = vdwg.mxu0
    %v305 = vxor.u32 %v300, 2147483648
    %v306 = vmul.f32 %v305, 1.442695
    %v307 = vpow.pop %v306
    %v308 = vadd.f32 %v307, 1.0
    %v309 = vrcp.pop %v308
    %v310 = vmul.f32 1.0, %v309
    %vm311 = vcmp.gt.f32.partialorder %v310, %v168
    %v312 = vsel %vm311, 1, 0
    %v313 = vcvt.s32.f32 %v312
    %v314 = vpack.c.bf16 %v313, %v313
    %v315 = vld [vmem:[#allocation10] sm:$0xff]
    %v316 = vld [vmem:[#allocation10 + $0x8] sm:$0xff]
    %v333 = vunpack.c.l.b16 %v97
    %v334 = vunpack.c.h.b16 %v97
    %v335 = vunpack.c.l.b16 %v98
    %v336 = vunpack.c.h.b16 %v98
    %v337 = vunpack.c.l.b16 %v99
    %v338 = vunpack.c.h.b16 %v99
    %v339 = vunpack.c.l.b16 %v100
    %v340 = vunpack.c.h.b16 %v100
    %v341 = vunpack.c.l.b16 %v101
    %v342 = vunpack.c.h.b16 %v101
    %v343 = vunpack.c.l.b16 %v102
    %v344 = vunpack.c.h.b16 %v102
    %v345 = vunpack.c.l.b16 %v103
    %v346 = vunpack.c.h.b16 %v103
    %v347 = vunpack.c.l.b16 %v104
    %v348 = vunpack.c.h.b16 %v104
    %v349 = vunpack.c.l.b16 %v105
    %v350 = vunpack.c.h.b16 %v105
    %v351 = vunpack.c.l.b16 %v106
    %v352 = vunpack.c.h.b16 %v106
    %v353 = vunpack.c.l.b16 %v107
    %v354 = vunpack.c.h.b16 %v107
    %v355 = vunpack.c.l.b16 %v108
    %v356 = vunpack.c.h.b16 %v108
    %v357 = vunpack.c.l.b16 %v109
    %v358 = vunpack.c.h.b16 %v109
    %v359 = vunpack.c.l.b16 %v110
    %v360 = vunpack.c.h.b16 %v110
    %v361 = vunpack.c.l.b16 %v111
    %v362 = vunpack.c.h.b16 %v111
    %v363 = vunpack.c.l.b16 %v112
    %v364 = vunpack.c.h.b16 %v112
    %v365 = vpack.c.b16 %v335, %v333
    %v366 = vpack.c.b16 %v336, %v334
    %v367 = vpack.c.b16 %v339, %v337
    %v368 = vpack.c.b16 %v340, %v338
    %v369 = vpack.c.b16 %v343, %v341
    %v370 = vpack.c.b16 %v344, %v342
    %v371 = vpack.c.b16 %v347, %v345
    %v372 = vpack.c.b16 %v348, %v346
    %v373 = vpack.c.b16 %v351, %v349
    %v374 = vpack.c.b16 %v352, %v350
    %v375 = vpack.c.b16 %v355, %v353
    %v376 = vpack.c.b16 %v356, %v354
    %v377 = vpack.c.b16 %v359, %v357
    %v378 = vpack.c.b16 %v360, %v358
    %v379 = vpack.c.b16 %v363, %v361
    %v380 = vpack.c.b16 %v364, %v362
    %397 = vmatprep.subr.bf16.mxu0 %v380
    %398 = vmatpush1.bf16.msra.mxu0 %v379
    %399 = vmatprep.subr.bf16.mxu0 %v378
    %400 = vmatpush1.bf16.msra.mxu0 %v377
    %401 = vmatprep.subr.bf16.mxu0 %v376
    %402 = vmatpush1.bf16.msra.mxu0 %v375
    %403 = vmatprep.subr.bf16.mxu0 %v374
    %404 = vmatpush1.bf16.msra.mxu0 %v373
    %405 = vmatprep.subr.bf16.mxu0 %v372
    %406 = vmatpush1.bf16.msra.mxu0 %v371
    %407 = vmatprep.subr.bf16.mxu0 %v370
    %408 = vmatpush1.bf16.msra.mxu0 %v369
    %409 = vmatprep.subr.bf16.mxu0 %v368
    %410 = vmatpush1.bf16.msra.mxu0 %v367
    %411 = vmatprep.subr.bf16.mxu0 %v366
    %412 = vmatpush1.bf16.msra.mxu0 %v365
    %413 = vmatprep.subr.bf16.mxu0 0
    %414 = vmatpush2.bf16.msra.mxu0 0
    %415 = vmatprep.subr.bf16.mxu0 0
    %416 = vmatpush2.bf16.msra.mxu0 0
    %417 = vmatprep.subr.bf16.mxu0 0
    %418 = vmatpush2.bf16.msra.mxu0 0
    %419 = vmatprep.subr.bf16.mxu0 0
    %420 = vmatpush2.bf16.msra.mxu0 0
    %421 = vmatprep.subr.bf16.mxu0 0
    %422 = vmatpush2.bf16.msra.mxu0 0
    %423 = vmatprep.subr.bf16.mxu0 0
    %424 = vmatpush2.bf16.msra.mxu0 0
    %425 = vmatprep.subr.bf16.mxu0 0
    %426 = vmatpush2.bf16.msra.mxu0 0
    %427 = vmatprep.subr.bf16.mxu0 0
    %428 = vmatpush2.bf16.msra.mxu0 0
    %429 = vmatprep.mubr.bf16.mxu0 0
    %430 = vmatmul.mubr.bf16.gmra.mxu0 %v314
    %v431 = vpop.f32.mrf.mxu0
    %v432 = vadd.f32 %v150, %v431
    %v433 = vpop.f32.mrf.mxu0
    %v434 = vadd.f32 %v154, %v433
    %v435 = vpop.f32.mrf.mxu0
    %v436 = vpop.f32.mrf.mxu0
    %437 = vdwg.mxu0
    %v438 = vxor.u32 %v432, 2147483648
    %v439 = vxor.u32 %v434, 2147483648
    %v440 = vmul.f32 %v438, 1.442695
    %v441 = vpow.pop %v440
    %v442 = vmul.f32 %v439, 1.442695
    %v443 = vpow.pop %v442
    %v444 = vadd.f32 %v441, 1.0
    %v445 = vadd.f32 %v443, 1.0
    %v446 = vrcp.pop %v444
    %v447 = vmul.f32 1.0, %v446
    %v448 = vrcp.pop %v445
    %v449 = vmul.f32 1.0, %v448
    %vm450 = vcmp.gt.f32.partialorder %v447, %v315
    %vm451 = vcmp.gt.f32.partialorder %v449, %v316
    %v452 = vsel %vm450, 1, 0
    %v453 = vsel %vm451, 1, 0
    %v454 = vcvt.s32.f32 %v452
    %v455 = vcvt.s32.f32 %v453
    %v456 = vpack.c.bf16 %v454, %v454
    %v457 = vpack.c.bf16 %v455, %v455
    %s458 = scalar_lea.vmem [#allocation8], 8
    %v459 = vld [vmem:[%s458] sm:$0xff]
    %460 = vmatprep.subr.bf16.mxu0 0
    %461 = vmatpush1.bf16.msra.mxu0 %v240
    %462 = vmatprep.subr.bf16.mxu0 0
    %463 = vmatpush1.bf16.msra.mxu0 %v239
    %464 = vmatprep.subr.bf16.mxu0 0
    %465 = vmatpush1.bf16.msra.mxu0 %v238
    %466 = vmatprep.subr.bf16.mxu0 0
    %467 = vmatpush1.bf16.msra.mxu0 %v237
    %468 = vmatprep.subr.bf16.mxu0 0
    %469 = vmatpush1.bf16.msra.mxu0 %v236
    %470 = vmatprep.subr.bf16.mxu0 0
    %471 = vmatpush1.bf16.msra.mxu0 %v235
    %472 = vmatprep.subr.bf16.mxu0 0
    %473 = vmatpush1.bf16.msra.mxu0 %v234
    %474 = vmatprep.subr.bf16.mxu0 0
    %475 = vmatpush1.bf16.msra.mxu0 %v233
    %476 = vmatprep.subr.bf16.mxu0 0
    %477 = vmatpush2.bf16.msra.mxu0 %v248
    %478 = vmatprep.subr.bf16.mxu0 0
    %479 = vmatpush2.bf16.msra.mxu0 %v247
    %480 = vmatprep.subr.bf16.mxu0 0
    %481 = vmatpush2.bf16.msra.mxu0 %v246
    %482 = vmatprep.subr.bf16.mxu0 0
    %483 = vmatpush2.bf16.msra.mxu0 %v245
    %484 = vmatprep.subr.bf16.mxu0 0
    %485 = vmatpush2.bf16.msra.mxu0 %v244
    %486 = vmatprep.subr.bf16.mxu0 0
    %487 = vmatpush2.bf16.msra.mxu0 %v243
    %488 = vmatprep.subr.bf16.mxu0 0
    %489 = vmatpush2.bf16.msra.mxu0 %v242
    %490 = vmatprep.subr.bf16.mxu0 0
    %491 = vmatpush2.bf16.msra.mxu0 %v241
    %492 = vmatprep.mubr.bf16.mxu0 %v457
    %493 = vmatmul.mubr.bf16.gmra.mxu0 %v456
    %v494 = vpop.f32.mrf.mxu0
    %v495 = vadd.f32 %v162, %v494
    %v496 = vpop.f32.mrf.mxu0
    %v497 = vpop.f32.mrf.mxu0
    %v498 = vpop.f32.mrf.mxu0
    %499 = vdwg.mxu0
    %v500 = vxor.u32 %v495, 2147483648
    %v501 = vmul.f32 %v500, 1.442695
    %v502 = vpow.pop %v501
    %v503 = vadd.f32 %v502, 1.0
    %v504 = vrcp.pop %v503
    %v505 = vmul.f32 1.0, %v504
    %vm506 = vcmp.gt.f32.partialorder %v505, %v459
    %v507 = vsel %vm506, 1, 0
    %v508 = vcvt.s32.f32 %v507
    %v509 = vpack.c.bf16 %v508, %v508
    %s510 = scalar_lea.vmem [#allocation10], 16
    %v511 = vld [vmem:[%s510] sm:$0xff]
    %v512 = vld [vmem:[%s510 + $0x8] sm:$0xff]
    %513 = vmatprep.subr.bf16.mxu0 %v380
    %514 = vmatpush1.bf16.msra.mxu0 %v379
    %515 = vmatprep.subr.bf16.mxu0 %v378
    %516 = vmatpush1.bf16.msra.mxu0 %v377
    %517 = vmatprep.subr.bf16.mxu0 %v376
    %518 = vmatpush1.bf16.msra.mxu0 %v375
    %519 = vmatprep.subr.bf16.mxu0 %v374
    %520 = vmatpush1.bf16.msra.mxu0 %v373
    %521 = vmatprep.subr.bf16.mxu0 %v372
    %522 = vmatpush1.bf16.msra.mxu0 %v371
    %523 = vmatprep.subr.bf16.mxu0 %v370
    %524 = vmatpush1.bf16.msra.mxu0 %v369
    %525 = vmatprep.subr.bf16.mxu0 %v368
    %526 = vmatpush1.bf16.msra.mxu0 %v367
    %527 = vmatprep.subr.bf16.mxu0 %v366
    %528 = vmatpush1.bf16.msra.mxu0 %v365
    %529 = vmatprep.subr.bf16.mxu0 0
    %530 = vmatpush2.bf16.msra.mxu0 0
    %531 = vmatprep.subr.bf16.mxu0 0
    %532 = vmatpush2.bf16.msra.mxu0 0
    %533 = vmatprep.subr.bf16.mxu0 0
    %534 = vmatpush2.bf16.msra.mxu0 0
    %535 = vmatprep.subr.bf16.mxu0 0
    %536 = vmatpush2.bf16.msra.mxu0 0
    %537 = vmatprep.subr.bf16.mxu0 0
    %538 = vmatpush2.bf16.msra.mxu0 0
    %539 = vmatprep.subr.bf16.mxu0 0
    %540 = vmatpush2.bf16.msra.mxu0 0
    %541 = vmatprep.subr.bf16.mxu0 0
    %542 = vmatpush2.bf16.msra.mxu0 0
    %543 = vmatprep.subr.bf16.mxu0 0
    %544 = vmatpush2.bf16.msra.mxu0 0
    %545 = vmatprep.mubr.bf16.mxu0 0
    %546 = vmatmul.mubr.bf16.gmra.mxu0 %v509
    %v547 = vpop.f32.mrf.mxu0
    %v548 = vadd.f32 %v150, %v547
    %v549 = vpop.f32.mrf.mxu0
    %v550 = vadd.f32 %v154, %v549
    %v551 = vpop.f32.mrf.mxu0
    %v552 = vpop.f32.mrf.mxu0
    %553 = vdwg.mxu0
    %v554 = vxor.u32 %v548, 2147483648
    %v555 = vxor.u32 %v550, 2147483648
    %v556 = vmul.f32 %v554, 1.442695
    %v557 = vpow.pop %v556
    %v558 = vmul.f32 %v555, 1.442695
    %v559 = vpow.pop %v558
    %v560 = vadd.f32 %v557, 1.0
    %v561 = vadd.f32 %v559, 1.0
    %v562 = vrcp.pop %v560
    %v563 = vmul.f32 1.0, %v562
    %v564 = vrcp.pop %v561
    %v565 = vmul.f32 1.0, %v564
    %vm566 = vcmp.gt.f32.partialorder %v563, %v511
    %vm567 = vcmp.gt.f32.partialorder %v565, %v512
    %v568 = vsel %vm566, 1, 0
    %v569 = vsel %vm567, 1, 0
    %v570 = vcvt.s32.f32 %v568
    %v571 = vcvt.s32.f32 %v569
    %v572 = vpack.c.bf16 %v570, %v570
    %v573 = vpack.c.bf16 %v571, %v571
    %s574 = scalar_lea.vmem [#allocation8], 16
    %v575 = vld [vmem:[%s574] sm:$0xff]
    %576 = vmatprep.subr.bf16.mxu0 0
    %577 = vmatpush1.bf16.msra.mxu0 %v240
    %578 = vmatprep.subr.bf16.mxu0 0
    %579 = vmatpush1.bf16.msra.mxu0 %v239
    %580 = vmatprep.subr.bf16.mxu0 0
    %581 = vmatpush1.bf16.msra.mxu0 %v238
    %582 = vmatprep.subr.bf16.mxu0 0
    %583 = vmatpush1.bf16.msra.mxu0 %v237
    %584 = vmatprep.subr.bf16.mxu0 0
    %585 = vmatpush1.bf16.msra.mxu0 %v236
    %586 = vmatprep.subr.bf16.mxu0 0
    %587 = vmatpush1.bf16.msra.mxu0 %v235
    %588 = vmatprep.subr.bf16.mxu0 0
    %589 = vmatpush1.bf16.msra.mxu0 %v234
    %590 = vmatprep.subr.bf16.mxu0 0
    %591 = vmatpush1.bf16.msra.mxu0 %v233
    %592 = vmatprep.subr.bf16.mxu0 0
    %593 = vmatpush2.bf16.msra.mxu0 %v248
    %594 = vmatprep.subr.bf16.mxu0 0
    %595 = vmatpush2.bf16.msra.mxu0 %v247
    %596 = vmatprep.subr.bf16.mxu0 0
    %597 = vmatpush2.bf16.msra.mxu0 %v246
    %598 = vmatprep.subr.bf16.mxu0 0
    %599 = vmatpush2.bf16.msra.mxu0 %v245
    %600 = vmatprep.subr.bf16.mxu0 0
    %601 = vmatpush2.bf16.msra.mxu0 %v244
    %602 = vmatprep.subr.bf16.mxu0 0
    %603 = vmatpush2.bf16.msra.mxu0 %v243
    %604 = vmatprep.subr.bf16.mxu0 0
    %605 = vmatpush2.bf16.msra.mxu0 %v242
    %606 = vmatprep.subr.bf16.mxu0 0
    %607 = vmatpush2.bf16.msra.mxu0 %v241
    %608 = vmatprep.mubr.bf16.mxu0 %v573
    %609 = vmatmul.mubr.bf16.gmra.mxu0 %v572
    %v610 = vpop.f32.mrf.mxu0
    %v611 = vadd.f32 %v162, %v610
    %v612 = vpop.f32.mrf.mxu0
    %v613 = vpop.f32.mrf.mxu0
    %v614 = vpop.f32.mrf.mxu0
    %615 = vdwg.mxu0
    %v616 = vxor.u32 %v611, 2147483648
    %v617 = vmul.f32 %v616, 1.442695
    %v618 = vpow.pop %v617
    %v619 = vadd.f32 %v618, 1.0
    %v620 = vrcp.pop %v619
    %v621 = vmul.f32 1.0, %v620
    %vm622 = vcmp.gt.f32.partialorder %v621, %v575
    %v623 = vsel %vm622, 1, 0
    %v624 = vcvt.s32.f32 %v623
    %v625 = vpack.c.bf16 %v624, %v624
    %s626 = scalar_lea.vmem [#allocation10], 32
    %v627 = vld [vmem:[%s626] sm:$0xff]
    %v628 = vld [vmem:[%s626 + $0x8] sm:$0xff]
    %629 = vmatprep.subr.bf16.mxu0 %v380
    %630 = vmatpush1.bf16.msra.mxu0 %v379
    %631 = vmatprep.subr.bf16.mxu0 %v378
    %632 = vmatpush1.bf16.msra.mxu0 %v377
    %633 = vmatprep.subr.bf16.mxu0 %v376
    %634 = vmatpush1.bf16.msra.mxu0 %v375
    %635 = vmatprep.subr.bf16.mxu0 %v374
    %636 = vmatpush1.bf16.msra.mxu0 %v373
    %637 = vmatprep.subr.bf16.mxu0 %v372
    %638 = vmatpush1.bf16.msra.mxu0 %v371
    %639 = vmatprep.subr.bf16.mxu0 %v370
    %640 = vmatpush1.bf16.msra.mxu0 %v369
    %641 = vmatprep.subr.bf16.mxu0 %v368
    %642 = vmatpush1.bf16.msra.mxu0 %v367
    %643 = vmatprep.subr.bf16.mxu0 %v366
    %644 = vmatpush1.bf16.msra.mxu0 %v365
    %645 = vmatprep.subr.bf16.mxu0 0
    %646 = vmatpush2.bf16.msra.mxu0 0
    %647 = vmatprep.subr.bf16.mxu0 0
    %648 = vmatpush2.bf16.msra.mxu0 0
    %649 = vmatprep.subr.bf16.mxu0 0
    %650 = vmatpush2.bf16.msra.mxu0 0
    %651 = vmatprep.subr.bf16.mxu0 0
    %652 = vmatpush2.bf16.msra.mxu0 0
    %653 = vmatprep.subr.bf16.mxu0 0
    %654 = vmatpush2.bf16.msra.mxu0 0
    %655 = vmatprep.subr.bf16.mxu0 0
    %656 = vmatpush2.bf16.msra.mxu0 0
    %657 = vmatprep.subr.bf16.mxu0 0
    %658 = vmatpush2.bf16.msra.mxu0 0
    %659 = vmatprep.subr.bf16.mxu0 0
    %660 = vmatpush2.bf16.msra.mxu0 0
    %661 = vmatprep.mubr.bf16.mxu0 0
    %662 = vmatmul.mubr.bf16.gmra.mxu0 %v625
    %v663 = vpop.f32.mrf.mxu0
    %v664 = vadd.f32 %v150, %v663
    %v665 = vpop.f32.mrf.mxu0
    %v666 = vadd.f32 %v154, %v665
    %v667 = vpop.f32.mrf.mxu0
    %v668 = vpop.f32.mrf.mxu0
    %669 = vdwg.mxu0
    %v670 = vxor.u32 %v664, 2147483648
    %v671 = vxor.u32 %v666, 2147483648
    %v672 = vmul.f32 %v670, 1.442695
    %v673 = vpow.pop %v672
    %v674 = vmul.f32 %v671, 1.442695
    %v675 = vpow.pop %v674
    %v676 = vadd.f32 %v673, 1.0
    %v677 = vadd.f32 %v675, 1.0
    %v678 = vrcp.pop %v676
    %v679 = vmul.f32 1.0, %v678
    %v680 = vrcp.pop %v677
    %v681 = vmul.f32 1.0, %v680
    %vm682 = vcmp.gt.f32.partialorder %v679, %v627
    %vm683 = vcmp.gt.f32.partialorder %v681, %v628
    %v684 = vsel %vm682, 1, 0
    %v685 = vsel %vm683, 1, 0
    %v686 = vcvt.s32.f32 %v684
    %v687 = vcvt.s32.f32 %v685
    %v688 = vpack.c.bf16 %v686, %v686
    %v689 = vpack.c.bf16 %v687, %v687
    %s690 = scalar_lea.vmem [#allocation8], 24
    %v691 = vld [vmem:[%s690] sm:$0xff]
    %692 = vmatprep.subr.bf16.mxu0 0
    %693 = vmatpush1.bf16.msra.mxu0 %v240
    %694 = vmatprep.subr.bf16.mxu0 0
    %695 = vmatpush1.bf16.msra.mxu0 %v239
    %696 = vmatprep.subr.bf16.mxu0 0
    %697 = vmatpush1.bf16.msra.mxu0 %v238
    %698 = vmatprep.subr.bf16.mxu0 0
    %699 = vmatpush1.bf16.msra.mxu0 %v237
    %700 = vmatprep.subr.bf16.mxu0 0
    %701 = vmatpush1.bf16.msra.mxu0 %v236
    %702 = vmatprep.subr.bf16.mxu0 0
    %703 = vmatpush1.bf16.msra.mxu0 %v235
    %704 = vmatprep.subr.bf16.mxu0 0
    %705 = vmatpush1.bf16.msra.mxu0 %v234
    %706 = vmatprep.subr.bf16.mxu0 0
    %707 = vmatpush1.bf16.msra.mxu0 %v233
    %708 = vmatprep.subr.bf16.mxu0 0
    %709 = vmatpush2.bf16.msra.mxu0 %v248
    %710 = vmatprep.subr.bf16.mxu0 0
    %711 = vmatpush2.bf16.msra.mxu0 %v247
    %712 = vmatprep.subr.bf16.mxu0 0
    %713 = vmatpush2.bf16.msra.mxu0 %v246
    %714 = vmatprep.subr.bf16.mxu0 0
    %715 = vmatpush2.bf16.msra.mxu0 %v245
    %716 = vmatprep.subr.bf16.mxu0 0
    %717 = vmatpush2.bf16.msra.mxu0 %v244
    %718 = vmatprep.subr.bf16.mxu0 0
    %719 = vmatpush2.bf16.msra.mxu0 %v243
    %720 = vmatprep.subr.bf16.mxu0 0
    %721 = vmatpush2.bf16.msra.mxu0 %v242
    %722 = vmatprep.subr.bf16.mxu0 0
    %723 = vmatpush2.bf16.msra.mxu0 %v241
    %724 = vmatprep.mubr.bf16.mxu0 %v689
    %725 = vmatmul.mubr.bf16.gmra.mxu0 %v688
    %v726 = vpop.f32.mrf.mxu0
    %v727 = vadd.f32 %v162, %v726
    %v728 = vpop.f32.mrf.mxu0
    %v729 = vpop.f32.mrf.mxu0
    %v730 = vpop.f32.mrf.mxu0
    %731 = vdwg.mxu0
    %v732 = vxor.u32 %v727, 2147483648
    %v733 = vmul.f32 %v732, 1.442695
    %v734 = vpow.pop %v733
    %v735 = vadd.f32 %v734, 1.0
    %v736 = vrcp.pop %v735
    %v737 = vmul.f32 1.0, %v736
    %vm738 = vcmp.gt.f32.partialorder %v737, %v691
    %v739 = vsel %vm738, 1, 0
    %v740 = vcvt.s32.f32 %v739
    %v741 = vpack.c.bf16 %v740, %v740
    %v742 = vunpack.c.l.bf16 %v688
    %v743 = vunpack.c.l.bf16 %v689
    %744 = vst [vmem:[#allocation11] sm:$0xff] %v742
    %745 = vst [vmem:[#allocation11 + $0x8] sm:$0xff] %v743
    %v746 = vunpack.c.l.bf16 %v741
    %747 = vst [vmem:[#allocation12] sm:$0xff] %v746
    // Predicated region
    $region50: #{tpu_custom_call.1} parent=1 // pred_check
      _
    $region51: #{tpu_custom_call.1} parent=1 // pred_check_branch
      %749 = sbr.rel (0) target = $region53
    $region52: #{tpu_custom_call.1} parent=1 // pred_region
      %s751 = ssub.s32 256, 256
      %752 = vsyncadd [#allocation4], %s751
      %s754 = sshll.u32 [#allocation11], 4
      %s755 = int_to_ptr.vmem [resolvable:$true] %s754
      %757 = dma.vmem_to_hbm [thread:$0]  %s755, 256, %s7, [#allocation4]
    $region53: #{tpu_custom_call.1} parent=1 // pred_fallthru
      _
    // Predicated region
    $region54: #{tpu_custom_call.1} parent=1 // pred_check
      _
    $region55: #{tpu_custom_call.1} parent=1 // pred_check_branch
      %759 = sbr.rel (0) target = $region57
    $region56: #{tpu_custom_call.1} parent=1 // pred_region
      %s761 = ssub.s32 128, 128
      %762 = vsyncadd [#allocation13], %s761
      %s764 = sshll.u32 [#allocation12], 4
      %s765 = int_to_ptr.vmem [resolvable:$true] %s764
      %767 = dma.vmem_to_hbm [thread:$0]  %s765, 128, %s8, [#allocation13]
    $region57: #{tpu_custom_call.1} parent=1 // pred_fallthru
      _
    // Predicated region
    $region58: #{tpu_custom_call.1} parent=1 // pred_check
      _
    $region59: #{tpu_custom_call.1} parent=1 // pred_check_branch
      %769 = sbr.rel (0) target = $region61
    $region60: #{tpu_custom_call.1} parent=1 // pred_region
      %770 = dma.done [#allocation4], 256
    $region61: #{tpu_custom_call.1} parent=1 // pred_fallthru
      _
    // Predicated region
    $region62: #{tpu_custom_call.1} parent=1 // pred_check
      _
    $region63: #{tpu_custom_call.1} parent=1 // pred_check_branch
      %772 = sbr.rel (0) target = $region65
    $region64: #{tpu_custom_call.1} parent=1 // pred_region
      %773 = dma.done [#allocation13], 128
    $region65: #{tpu_custom_call.1} parent=1 // pred_fallthru
      _
    %774 = vsyncpa [#allocation3], 1
    %775 = vsyncpa [#allocation6], 1
    %776 = vsyncpa [#allocation9], 1
    %777 = vsyncpa [#allocation4], 1
    %778 = vsyncpa [#allocation13], 1

</llo_original>
